<compile_context>
chip_gen: v7x
topology: tpu7x:2x2x1
jax: 0.10.0
libtpu: 0.0.40
codegen_flags: <defaults>
</compile_context>

<pallas_src>
import jax
import jax.numpy as jnp
from jax.experimental import pallas as pl
from jax.experimental.pallas import tpu as pltpu

_MIB = 1024 * 1024


def _round_up(x, m):
    return ((x + m - 1) // m) * m


def _vmem_budget_bytes():
    """Per-core VMEM budget with headroom for compiler-internal scratch."""
    try:
        cap = int(pltpu.get_tpu_info().vmem_capacity_bytes)
    except Exception:  # conservative fallback sized for v7x (64 MiB / TC)
        cap = 64 * _MIB
    # 64 MiB -> 48 MiB (v7x); 128 MiB -> ~100 MiB (v5e / v6e).
    return min(cap - 16 * _MIB, int(cap * 0.78))


# ----------------------------- kernels ------------------------------------- #
def _mlp_resident_kernel(x_ref, wfc_ref, bfc_ref, wproj_ref, bproj_ref, o_ref):
    # Full weights resident in VMEM; one row tile of x/out per grid step.
    h = jnp.dot(x_ref[...], wfc_ref[...], preferred_element_type=jnp.float32)
    h = h + bfc_ref[...]
    h = jnp.maximum(h, 0.0)
    h = h * h                                     # relu(h)^2 in f32 (VPU)
    o = jnp.dot(h.astype(wproj_ref.dtype), wproj_ref[...],
                preferred_element_type=jnp.float32)
    o_ref[...] = (o + bproj_ref[...]).astype(o_ref.dtype)


def _mlp_streaming_kernel(x_ref, wfc_ref, bfc_ref, wproj_ref, bproj_ref, o_ref,
                          acc_ref):
    # Hidden dim tiled; f32 accumulator resident across the k axis.
    k = pl.program_id(1)

    @pl.when(k == 0)
    def _():
        acc_ref[...] = jnp.zeros_like(acc_ref)

    h = jnp.dot(x_ref[...], wfc_ref[...], preferred_element_type=jnp.float32)
    h = h + bfc_ref[...]
    h = jnp.maximum(h, 0.0)
    h = h * h                                     # elementwise over H -> exact per chunk
    acc_ref[...] += jnp.dot(h.astype(wproj_ref.dtype), wproj_ref[...],
                            preferred_element_type=jnp.float32)

    @pl.when(k == pl.num_programs(1) - 1)
    def _():
        o_ref[...] = (acc_ref[...] + bproj_ref[...]).astype(o_ref.dtype)


# ----------------------------- planning ------------------------------------ #
def _resident_footprint(tm, C, H, in_b, out_b):
    return (2 * tm * C * in_b            # x row tile (double-buffered)
            + 2 * 2 * C * H * in_b       # W_fc + W_proj (pipeline allocates 2 bufs)
            + 2 * 2 * (H + C) * 4        # biases (f32)
            + 2 * tm * C * out_b         # out row tile (double-buffered)
            + tm * H * 4                 # f32 h intermediate
            + tm * C * 4                 # f32 o before cast
            + 2 * _MIB)                  # slack


def _streaming_footprint(tm, th, C, H, in_b, out_b):
    return (2 * tm * C * in_b
            + 2 * C * th * in_b          # W_fc hidden chunk
            + 2 * th * C * in_b          # W_proj hidden chunk
            + 2 * 2 * (th + C) * 4       # bias chunks
            + 2 * tm * C * out_b
            + tm * C * 4                 # f32 accumulator scratch
            + tm * th * 4                # f32 h intermediate
            + 2 * _MIB)


# ----------------------------- wrapper -------------------------------------- #
def mlp_forward(x, w_fc, b_fc, w_proj, b_proj, *, tm=512, th=1024,
                compute_dtype=jnp.bfloat16):
    """Fused GPT MLP: relu(x @ W_fc + b_fc)^2 @ W_proj + b_proj.

    x: (B, T, C).  w_fc: (C, 4C) (transposed nn.Linear weight), b_fc: (4C,),
    w_proj: (4C, C), b_proj: (C,).  Pass bf16 weights to avoid a wrapper cast.
    """
    B, T, C = x.shape
    Cw, H = w_fc.shape
    assert Cw == C and w_proj.shape == (H, C)
    assert b_fc.shape == (H,) and b_proj.shape == (C,)
    out_dtype = x.dtype
    M = B * T

    in_b = jnp.dtype(compute_dtype).itemsize
    out_b = jnp.dtype(out_dtype).itemsize
    budget = _vmem_budget_bytes()

    def _clamp_tm(t):
        # Multiple of 16 (bf16 sublane packing), clamped to the problem size.
        return max(16, min(_round_up(t, 16), _round_up(M, 16)))

    # --- Resident-weights fast path: weights DMA'd into VMEM once. ----------
    plan = None
    for t in sorted({_clamp_tm(v) for v in (tm, 512, 256, 128)}, reverse=True):
        if _resident_footprint(t, C, H, in_b, out_b) <= budget:
            plan = ("resident", t, H)
            break

    # --- Streaming fallback: hidden dim tiled, weights re-streamed. ---------
    if plan is None:
        big_vmem = budget > 64 * _MIB   # v5e / v6e class parts
        tm_cands = sorted({_clamp_tm(v) for v in
                           ((tm, 1024, 512, 256, 128) if big_vmem
                            else (tm, 512, 256, 128))}, reverse=True)
        th_cands = sorted(
            {d for d in range(128, min(H, th) + 1, 128) if H % d == 0}
            | ({H} if H <= th else set()),
            reverse=True) or [H]
        for t in tm_cands:
            for tk in th_cands:
                if _streaming_footprint(t, tk, C, H, in_b, out_b) <= budget:
                    plan = ("streaming", t, tk)
                    break
            if plan is not None:
                break
        if plan is None:                 # last resort: smallest tiles
            plan = ("streaming", _clamp_tm(128), th_cands[-1])

    mode, tm_sel, th_sel = plan
    n_row_tiles = pl.cdiv(M, tm_sel)

    # Casts only if needed (callers should hold bf16 weights / activations).
    x2d = x.reshape(M, C)
    if x2d.dtype != compute_dtype:
        x2d = x2d.astype(compute_dtype)
    wfc = w_fc if w_fc.dtype == compute_dtype else w_fc.astype(compute_dtype)
    wproj = w_proj if w_proj.dtype == compute_dtype else w_proj.astype(compute_dtype)
    bfc = b_fc.reshape(1, H).astype(jnp.float32)
    bproj = b_proj.reshape(1, C).astype(jnp.float32)

    weight_passes = 1 if mode == "resident" else n_row_tiles
    cost = pl.CostEstimate(
        flops=4 * M * C * H,                       # two matmuls, 2*M*C*H each
        transcendentals=0,
        bytes_accessed=(M * C * in_b               # x
                        + M * C * out_b            # out
                        + 2 * C * H * in_b * weight_passes   # W_fc + W_proj
                        + (H + C) * 4 * weight_passes),      # biases
    )

    if mode == "resident":
        grid = (n_row_tiles,)
        in_specs = [
            pl.BlockSpec((tm_sel, C), lambda i: (i, 0)),   # x row tile
            pl.BlockSpec((C, H), lambda i: (0, 0)),        # W_fc (resident)
            pl.BlockSpec((1, H), lambda i: (0, 0)),        # b_fc
            pl.BlockSpec((H, C), lambda i: (0, 0)),        # W_proj (resident)
            pl.BlockSpec((1, C), lambda i: (0, 0)),        # b_proj
        ]
        out_specs = pl.BlockSpec((tm_sel, C), lambda i: (i, 0))
        scratch_shapes = []
        kernel = _mlp_resident_kernel
        dim_sem = ("parallel",)
    else:
        grid = (n_row_tiles, H // th_sel)
        in_specs = [
            pl.BlockSpec((tm_sel, C), lambda i, k: (i, 0)),    # x row tile
            pl.BlockSpec((C, th_sel), lambda i, k: (0, k)),    # W_fc chunk
            pl.BlockSpec((1, th_sel), lambda i, k: (0, k)),    # b_fc chunk
            pl.BlockSpec((th_sel, C), lambda i, k: (k, 0)),    # W_proj chunk
            pl.BlockSpec((1, C), lambda i, k: (0, 0)),         # b_proj
        ]
        out_specs = pl.BlockSpec((tm_sel, C), lambda i, k: (i, 0))
        scratch_shapes = [pltpu.VMEM((tm_sel, C), jnp.float32)]
        kernel = _mlp_streaming_kernel
        dim_sem = ("parallel", "arbitrary")

    out2d = pl.pallas_call(
        kernel,
        out_shape=jax.ShapeDtypeStruct((M, C), out_dtype),
        grid_spec=pltpu.PrefetchScalarGridSpec(
            num_scalar_prefetch=0,
            grid=grid,
            in_specs=in_specs,
            out_specs=out_specs,
            scratch_shapes=scratch_shapes,
        ),
        compiler_params=pltpu.CompilerParams(
            dimension_semantics=dim_sem,
            vmem_limit_bytes=int(budget),
        ),
        cost_estimate=cost,
    )(x2d, wfc, bfc, wproj, bproj)

    return out2d.reshape(B, T, C)


if __name__ == "__main__":
    # Small config consistent with the module: n_embd=128, hidden=4*n_embd=512.
    B, T, C = 2, 8, 128
    H = 4 * C

    key = jax.random.PRNGKey(0)
    kx, k1, k2, k3, k4 = jax.random.split(key, 5)

    x = jax.random.normal(kx, (B, T, C), dtype=jnp.float32)
    # nn.Linear weights stored transposed; converted to bf16 ONCE here so the
    # wrapper does not pay a per-call cast (per perf review).
    w_fc = (jax.random.normal(k1, (C, H), dtype=jnp.float32)
            * (1.0 / C ** 0.5)).astype(jnp.bfloat16)
    b_fc = jax.random.normal(k2, (H,), dtype=jnp.float32) * 0.01
    w_proj = (jax.random.normal(k3, (H, C), dtype=jnp.float32)
              * (1.0 / H ** 0.5)).astype(jnp.bfloat16)
    b_proj = jax.random.normal(k4, (C,), dtype=jnp.float32) * 0.01

    out = mlp_forward(x, w_fc, b_fc, w_proj, b_proj)
    out = jax.block_until_ready(out)

    # Reference: same math with matmul operands rounded through bf16 (matching
    # what the kernel feeds the MXU); f32 accumulation in both cases.
    def rt(a):
        return a.astype(jnp.bfloat16).astype(jnp.float32)

    hp = jax.lax.Precision.HIGHEST
    h_ref = jnp.einsum("btc,ch->bth", rt(x), w_fc.astype(jnp.float32),
                       precision=hp) + b_fc
    h_ref = jnp.square(jnp.maximum(h_ref, 0.0))
    ref = jnp.einsum("bth,hc->btc", rt(h_ref), w_proj.astype(jnp.float32),
                     precision=hp) + b_proj

    assert out.shape == (B, T, C)
    assert out.dtype == x.dtype
    assert jnp.allclose(out, ref, atol=2e-2, rtol=2e-2), "mismatch vs reference"

    print("KERNEL_OK")
</pallas_src>

<mosaic_0001>
module attributes {stable_mosaic.version = 11 : i64} {
  func.func @_mlp_resident_kernel(%arg0: i32, %arg1: memref<16x128xbf16, #tpu.memory_space<vmem>>, %arg2: memref<128x512xbf16, #tpu.memory_space<vmem>>, %arg3: memref<1x512xf32, #tpu.memory_space<vmem>>, %arg4: memref<512x128xbf16, #tpu.memory_space<vmem>>, %arg5: memref<1x128xf32, #tpu.memory_space<vmem>>, %arg6: memref<16x128xf32, #tpu.memory_space<vmem>>) attributes {dimension_semantics = [#tpu.dimension_semantics<parallel>], iteration_bounds = array<i64: 1>, scalar_prefetch = 0 : i64, scratch_operands = 0 : i64, tpu.core_type = #tpu.core_type<tc>, window_params = [{transform_indices = @transform_0, window_bounds = array<i64: 16, 128>}, {pipeline_mode = #tpu.pipeline_mode<synchronous>, transform_indices = @transform_1, window_bounds = array<i64: 128, 512>}, {pipeline_mode = #tpu.pipeline_mode<synchronous>, transform_indices = @transform_2, window_bounds = array<i64: 1, 512>}, {pipeline_mode = #tpu.pipeline_mode<synchronous>, transform_indices = @transform_3, window_bounds = array<i64: 512, 128>}, {pipeline_mode = #tpu.pipeline_mode<synchronous>, transform_indices = @transform_4, window_bounds = array<i64: 1, 128>}, {transform_indices = @transform_5, window_bounds = array<i64: 16, 128>}]} {
    %c0 = arith.constant 0 : index
    %c0_0 = arith.constant 0 : index
    %0 = vector.load %arg1[%c0, %c0_0] : memref<16x128xbf16, #tpu.memory_space<vmem>>, vector<16x128xbf16>
    %c0_1 = arith.constant 0 : index
    %c0_2 = arith.constant 0 : index
    %1 = vector.load %arg2[%c0_1, %c0_2] : memref<128x512xbf16, #tpu.memory_space<vmem>>, vector<128x512xbf16>
    %cst = arith.constant dense<0.000000e+00> : vector<16x512xf32>
    %2 = tpu.matmul %0, %1, %cst {dimension_numbers = #tpu.dot_dimension_numbers<[1], [0], [0], [1], [0, 0, 1, 1], [], []>} : vector<16x128xbf16>, vector<128x512xbf16>, vector<16x512xf32> -> vector<16x512xf32>
    %c0_3 = arith.constant 0 : index
    %c0_4 = arith.constant 0 : index
    %3 = vector.load %arg3[%c0_3, %c0_4] : memref<1x512xf32, #tpu.memory_space<vmem>>, vector<1x512xf32>
    %4 = vector.broadcast %3 : vector<1x512xf32> to vector<16x512xf32>
    %5 = arith.addf %2, %4 : vector<16x512xf32>
    %cst_5 = arith.constant 0.000000e+00 : f32
    %6 = vector.broadcast %cst_5 : f32 to vector<16x512xf32>
    %7 = arith.maximumf %5, %6 : vector<16x512xf32>
    %8 = arith.mulf %7, %7 : vector<16x512xf32>
    %9 = arith.truncf %8 : vector<16x512xf32> to vector<16x512xbf16>
    %c0_6 = arith.constant 0 : index
    %c0_7 = arith.constant 0 : index
    %10 = vector.load %arg4[%c0_6, %c0_7] : memref<512x128xbf16, #tpu.memory_space<vmem>>, vector<512x128xbf16>
    %cst_8 = arith.constant dense<0.000000e+00> : vector<16x128xf32>
    %11 = tpu.matmul %9, %10, %cst_8 {dimension_numbers = #tpu.dot_dimension_numbers<[1], [0], [0], [1], [0, 0, 1, 1], [], []>} : vector<16x512xbf16>, vector<512x128xbf16>, vector<16x128xf32> -> vector<16x128xf32>
    %c0_9 = arith.constant 0 : index
    %c0_10 = arith.constant 0 : index
    %12 = vector.load %arg5[%c0_9, %c0_10] : memref<1x128xf32, #tpu.memory_space<vmem>>, vector<1x128xf32>
    %13 = vector.broadcast %12 : vector<1x128xf32> to vector<16x128xf32>
    %14 = arith.addf %11, %13 : vector<16x128xf32>
    %c0_11 = arith.constant 0 : index
    %c0_12 = arith.constant 0 : index
    %15 = vector.load %arg6[%c0_11, %c0_12] : memref<16x128xf32, #tpu.memory_space<vmem>>, vector<16x128xf32>
    tpu.vector_store %arg6[%c0_11, %c0_12], %14 {strides = array<i32>} : memref<16x128xf32, #tpu.memory_space<vmem>>, vector<16x128xf32>,
    return
  }
  func.func @transform_0(%arg0: i32) -> (i32, i32) {
    %c0_i32 = arith.constant 0 : i32
    %c0_i32_0 = arith.constant 0 : i32
    return %arg0, %c0_i32 : i32, i32
  }
  func.func @transform_1(%arg0: i32) -> (i32, i32) {
    %c0_i32 = arith.constant 0 : i32
    %c0_i32_0 = arith.constant 0 : i32
    %c0_i32_1 = arith.constant 0 : i32
    return %c0_i32, %c0_i32_0 : i32, i32
  }
  func.func @transform_2(%arg0: i32) -> (i32, i32) {
    %c0_i32 = arith.constant 0 : i32
    %c0_i32_0 = arith.constant 0 : i32
    %c0_i32_1 = arith.constant 0 : i32
    return %c0_i32, %c0_i32_0 : i32, i32
  }
  func.func @transform_3(%arg0: i32) -> (i32, i32) {
    %c0_i32 = arith.constant 0 : i32
    %c0_i32_0 = arith.constant 0 : i32
    %c0_i32_1 = arith.constant 0 : i32
    return %c0_i32, %c0_i32_0 : i32, i32
  }
  func.func @transform_4(%arg0: i32) -> (i32, i32) {
    %c0_i32 = arith.constant 0 : i32
    %c0_i32_0 = arith.constant 0 : i32
    %c0_i32_1 = arith.constant 0 : i32
    return %c0_i32, %c0_i32_0 : i32, i32
  }
  func.func @transform_5(%arg0: i32) -> (i32, i32) {
    %c0_i32 = arith.constant 0 : i32
    %c0_i32_0 = arith.constant 0 : i32
    return %arg0, %c0_i32 : i32, i32
  }
}

</mosaic_0001>

<llo_original>
// kernel: tpu_custom_call.1
$region0: #{tpu_custom_call.1}
  #allocation0 [shape = 'u32[]', space=smem, size = 0x4, offset = 0x4, fixed_abs, tag = 'smem constant byte address 0x4 - core index']
  #allocation1 [shape = 'u32[144,128]{1,0:T(1,128)}', space=vmem, size = 0x12000, scoped, tag = 'internal scratch']
  %s0 = inlined_call_operand.hbm [shape: bf16[16,128], index: 0, kind: input, shape index: {}]
  %s1 = inlined_call_operand.hbm [shape: bf16[128,512], index: 1, kind: input, shape index: {}]
  %s2 = inlined_call_operand.vmem [shape: f32[1,512], index: 2, kind: input, shape index: {}]
  %s3 = inlined_call_operand.hbm [shape: bf16[512,128], index: 3, kind: input, shape index: {}]
  %s4 = inlined_call_operand.vmem [shape: f32[1,128], index: 4, kind: input, shape index: {}]
  %s5 = inlined_call_operand.hbm [shape: f32[16,128], index: 5, kind: output, shape index: {}]
  %s6 = sld [smem:[#allocation0]]
  $region42: #{tpu_custom_call.1} parent=0
    _
  %s8 = ssub.s32 1, %s6
  %s9 = scalar_select 0, %s8, %s6
  $region1: #{tpu_custom_call.1} parent=0
    #allocation2 [shape = 'u8[4096]{0}', space=vmem, size = 0x1000, scoped, tag = 'input window, operand 0, single buffered']
    #allocation3 [shape = 's32[1]{0}', space=sflag, size = 0x4, scoped, tag = 'scoped memory for tpu_custom_call.1']
    #allocation4 [shape = 's32[1]{0}', space=sflag, size = 0x4, scoped, tag = 'scoped memory for tpu_custom_call.1']
    #allocation5 [shape = 'u8[131072]{0}', space=vmem, size = 0x20000, scoped, tag = 'input window, operand 1, single buffered']
    #allocation6 [shape = 's32[1]{0}', space=sflag, size = 0x4, scoped, tag = 'scoped memory for tpu_custom_call.1']
    #allocation7 [shape = 'u8[131072]{0}', space=vmem, size = 0x20000, scoped, tag = 'input window, operand 3, single buffered']
    #allocation8 [shape = 'u8[8192]{0}', space=vmem, size = 0x2000, scoped, tag = 'output window, operand 0, single buffered']
    %10 = vsyncpa [#allocation3], 0
    %11 = vsyncpa [#allocation6], 0
    %12 = vsyncpa [#allocation4], 0
    // Predicated region
    $region2: #{tpu_custom_call.1} parent=1 // pred_check
      _
    $region3: #{tpu_custom_call.1} parent=1 // pred_check_branch
      %14 = sbr.rel (0) target = $region5
    $region4: #{tpu_custom_call.1} parent=1 // pred_region
      %s16 = ssub.s32 128, 128
      %17 = vsyncadd [#allocation3], %s16
      %s18 = sshll.u32 [#allocation2], 4
      %s19 = int_to_ptr.vmem [resolvable:$true] %s18
      %24 = dma.hbm_to_vmem [thread:$0]  %s0, 128, %s19, [#allocation3], 64, 64, 4
    $region5: #{tpu_custom_call.1} parent=1 // pred_fallthru
      _
    // Predicated region
    $region6: #{tpu_custom_call.1} parent=1 // pred_check
      _
    $region7: #{tpu_custom_call.1} parent=1 // pred_check_branch
      %26 = sbr.rel (0) target = $region9
    $region8: #{tpu_custom_call.1} parent=1 // pred_region
      %s28 = ssub.s32 4096, 4096
      %29 = vsyncadd [#allocation6], %s28
      %s30 = sshll.u32 [#allocation5], 4
      %s31 = int_to_ptr.vmem [resolvable:$true] %s30
      %36 = dma.hbm_to_vmem [thread:$0]  %s1, 4096, %s31, [#allocation6], 256, 256, 16
    $region9: #{tpu_custom_call.1} parent=1 // pred_fallthru
      _
    // Predicated region
    $region10: #{tpu_custom_call.1} parent=1 // pred_check
      _
    $region11: #{tpu_custom_call.1} parent=1 // pred_check_branch
      %38 = sbr.rel (0) target = $region13
    $region12: #{tpu_custom_call.1} parent=1 // pred_region
      _
    $region13: #{tpu_custom_call.1} parent=1 // pred_fallthru
      _
    // Predicated region
    $region14: #{tpu_custom_call.1} parent=1 // pred_check
      _
    $region15: #{tpu_custom_call.1} parent=1 // pred_check_branch
      %40 = sbr.rel (0) target = $region17
    $region16: #{tpu_custom_call.1} parent=1 // pred_region
      %s42 = ssub.s32 4096, 4096
      %43 = vsyncadd [#allocation6], %s42
      %s44 = sshll.u32 [#allocation7], 4
      %s45 = int_to_ptr.vmem [resolvable:$true] %s44
      %50 = dma.hbm_to_vmem [thread:$0]  %s3, 4096, %s45, [#allocation6], 64, 64, 4
    $region17: #{tpu_custom_call.1} parent=1 // pred_fallthru
      _
    // Predicated region
    $region18: #{tpu_custom_call.1} parent=1 // pred_check
      _
    $region19: #{tpu_custom_call.1} parent=1 // pred_check_branch
      %52 = sbr.rel (0) target = $region21
    $region20: #{tpu_custom_call.1} parent=1 // pred_region
      _
    $region21: #{tpu_custom_call.1} parent=1 // pred_fallthru
      _
    // Predicated region
    $region22: #{tpu_custom_call.1} parent=1 // pred_check
      _
    $region23: #{tpu_custom_call.1} parent=1 // pred_check_branch
      %54 = sbr.rel (0) target = $region25
    $region24: #{tpu_custom_call.1} parent=1 // pred_region
      %55 = dma.done [#allocation3], 128
    $region25: #{tpu_custom_call.1} parent=1 // pred_fallthru
      _
    // Predicated region
    $region26: #{tpu_custom_call.1} parent=1 // pred_check
      _
    $region27: #{tpu_custom_call.1} parent=1 // pred_check_branch
      %57 = sbr.rel (0) target = $region29
    $region28: #{tpu_custom_call.1} parent=1 // pred_region
      %58 = dma.done [#allocation6], 4096
    $region29: #{tpu_custom_call.1} parent=1 // pred_fallthru
      _
    // Predicated region
    $region30: #{tpu_custom_call.1} parent=1 // pred_check
      _
    $region31: #{tpu_custom_call.1} parent=1 // pred_check_branch
      %60 = sbr.rel (0) target = $region33
    $region32: #{tpu_custom_call.1} parent=1 // pred_region
      %61 = dma.done [#allocation6], 4096
    $region33: #{tpu_custom_call.1} parent=1 // pred_fallthru
      _
    %v63 = vld [vmem:[#allocation2] sm:$0xf]
    %v64 = vld [vmem:[#allocation2 + $0x4] sm:$0xf]
    %v65 = vld [vmem:[#allocation5] sm:$0xff]
    %v66 = vld [vmem:[#allocation5 + $0x8] sm:$0xff]
    %v67 = vld [vmem:[#allocation5 + $0x10] sm:$0xff]
    %v68 = vld [vmem:[#allocation5 + $0x18] sm:$0xff]
    %v69 = vld [vmem:[#allocation5 + $0x20] sm:$0xff]
    %v70 = vld [vmem:[#allocation5 + $0x28] sm:$0xff]
    %v71 = vld [vmem:[#allocation5 + $0x30] sm:$0xff]
    %v72 = vld [vmem:[#allocation5 + $0x38] sm:$0xff]
    %v73 = vld [vmem:[#allocation5 + $0x40] sm:$0xff]
    %v74 = vld [vmem:[#allocation5 + $0x48] sm:$0xff]
    %v75 = vld [vmem:[#allocation5 + $0x50] sm:$0xff]
    %v76 = vld [vmem:[#allocation5 + $0x58] sm:$0xff]
    %v77 = vld [vmem:[#allocation5 + $0x60] sm:$0xff]
    %v78 = vld [vmem:[#allocation5 + $0x68] sm:$0xff]
    %v79 = vld [vmem:[#allocation5 + $0x70] sm:$0xff]
    %v80 = vld [vmem:[#allocation5 + $0x78] sm:$0xff]
    %v81 = vld [vmem:[#allocation5 + $0x80] sm:$0xff]
    %v82 = vld [vmem:[#allocation5 + $0x88] sm:$0xff]
    %v83 = vld [vmem:[#allocation5 + $0x90] sm:$0xff]
    %v84 = vld [vmem:[#allocation5 + $0x98] sm:$0xff]
    %v85 = vld [vmem:[#allocation5 + $0xa0] sm:$0xff]
    %v86 = vld [vmem:[#allocation5 + $0xa8] sm:$0xff]
    %v87 = vld [vmem:[#allocation5 + $0xb0] sm:$0xff]
    %v88 = vld [vmem:[#allocation5 + $0xb8] sm:$0xff]
    %v89 = vld [vmem:[#allocation5 + $0xc0] sm:$0xff]
    %v90 = vld [vmem:[#allocation5 + $0xc8] sm:$0xff]
    %v91 = vld [vmem:[#allocation5 + $0xd0] sm:$0xff]
    %v92 = vld [vmem:[#allocation5 + $0xd8] sm:$0xff]
    %v93 = vld [vmem:[#allocation5 + $0xe0] sm:$0xff]
    %v94 = vld [vmem:[#allocation5 + $0xe8] sm:$0xff]
    %v95 = vld [vmem:[#allocation5 + $0xf0] sm:$0xff]
    %v96 = vld [vmem:[#allocation5 + $0xf8] sm:$0xff]
    %v97 = vld [vmem:[%s2] sm:$0xf]
    %v99 = vlaneseq
    %v100 = vshrl.u32 %v99, 7
    %v101 = vsub.s32 0, %v100
    %v102 = vrot.slane %v97, %v101
    %v103 = vlaneseq
    %v104 = vshrl.u32 %v103, 7
    %v105 = vsub.s32 1, %v104
    %v106 = vrot.slane %v97, %v105
    %v107 = vlaneseq
    %v108 = vshrl.u32 %v107, 7
    %v109 = vsub.s32 2, %v108
    %v110 = vrot.slane %v97, %v109
    %v111 = vlaneseq
    %v112 = vshrl.u32 %v111, 7
    %v113 = vsub.s32 3, %v112
    %v114 = vrot.slane %v97, %v113
    %v121 = vunpack.c.l.b16 %v63
    %v122 = vunpack.c.l.b16 %v64
    %v123 = vpack.c.b16 %v122, %v121
    %v157 = vunpack.c.l.b16 %v65
    %v158 = vunpack.c.h.b16 %v65
    %v159 = vunpack.c.l.b16 %v66
    %v160 = vunpack.c.h.b16 %v66
    %v161 = vunpack.c.l.b16 %v67
    %v162 = vunpack.c.h.b16 %v67
    %v163 = vunpack.c.l.b16 %v68
    %v164 = vunpack.c.h.b16 %v68
    %v165 = vunpack.c.l.b16 %v69
    %v166 = vunpack.c.h.b16 %v69
    %v167 = vunpack.c.l.b16 %v70
    %v168 = vunpack.c.h.b16 %v70
    %v169 = vunpack.c.l.b16 %v71
    %v170 = vunpack.c.h.b16 %v71
    %v171 = vunpack.c.l.b16 %v72
    %v172 = vunpack.c.h.b16 %v72
    %v173 = vunpack.c.l.b16 %v73
    %v174 = vunpack.c.h.b16 %v73
    %v175 = vunpack.c.l.b16 %v74
    %v176 = vunpack.c.h.b16 %v74
    %v177 = vunpack.c.l.b16 %v75
    %v178 = vunpack.c.h.b16 %v75
    %v179 = vunpack.c.l.b16 %v76
    %v180 = vunpack.c.h.b16 %v76
    %v181 = vunpack.c.l.b16 %v77
    %v182 = vunpack.c.h.b16 %v77
    %v183 = vunpack.c.l.b16 %v78
    %v184 = vunpack.c.h.b16 %v78
    %v185 = vunpack.c.l.b16 %v79
    %v186 = vunpack.c.h.b16 %v79
    %v187 = vunpack.c.l.b16 %v80
    %v188 = vunpack.c.h.b16 %v80
    %v189 = vunpack.c.l.b16 %v81
    %v190 = vunpack.c.h.b16 %v81
    %v191 = vunpack.c.l.b16 %v82
    %v192 = vunpack.c.h.b16 %v82
    %v193 = vunpack.c.l.b16 %v83
    %v194 = vunpack.c.h.b16 %v83
    %v195 = vunpack.c.l.b16 %v84
    %v196 = vunpack.c.h.b16 %v84
    %v197 = vunpack.c.l.b16 %v85
    %v198 = vunpack.c.h.b16 %v85
    %v199 = vunpack.c.l.b16 %v86
    %v200 = vunpack.c.h.b16 %v86
    %v201 = vunpack.c.l.b16 %v87
    %v202 = vunpack.c.h.b16 %v87
    %v203 = vunpack.c.l.b16 %v88
    %v204 = vunpack.c.h.b16 %v88
    %v205 = vunpack.c.l.b16 %v89
    %v206 = vunpack.c.h.b16 %v89
    %v207 = vunpack.c.l.b16 %v90
    %v208 = vunpack.c.h.b16 %v90
    %v209 = vunpack.c.l.b16 %v91
    %v210 = vunpack.c.h.b16 %v91
    %v211 = vunpack.c.l.b16 %v92
    %v212 = vunpack.c.h.b16 %v92
    %v213 = vunpack.c.l.b16 %v93
    %v214 = vunpack.c.h.b16 %v93
    %v215 = vunpack.c.l.b16 %v94
    %v216 = vunpack.c.h.b16 %v94
    %v217 = vunpack.c.l.b16 %v95
    %v218 = vunpack.c.h.b16 %v95
    %v219 = vunpack.c.l.b16 %v96
    %v220 = vunpack.c.h.b16 %v96
    %v221 = vpack.c.b16 %v161, %v157
    %v222 = vpack.c.b16 %v162, %v158
    %v223 = vpack.c.b16 %v163, %v159
    %v224 = vpack.c.b16 %v164, %v160
    %v225 = vpack.c.b16 %v169, %v165
    %v226 = vpack.c.b16 %v170, %v166
    %v227 = vpack.c.b16 %v171, %v167
    %v228 = vpack.c.b16 %v172, %v168
    %v229 = vpack.c.b16 %v177, %v173
    %v230 = vpack.c.b16 %v178, %v174
    %v231 = vpack.c.b16 %v179, %v175
    %v232 = vpack.c.b16 %v180, %v176
    %v233 = vpack.c.b16 %v185, %v181
    %v234 = vpack.c.b16 %v186, %v182
    %v235 = vpack.c.b16 %v187, %v183
    %v236 = vpack.c.b16 %v188, %v184
    %v237 = vpack.c.b16 %v193, %v189
    %v238 = vpack.c.b16 %v194, %v190
    %v239 = vpack.c.b16 %v195, %v191
    %v240 = vpack.c.b16 %v196, %v192
    %v241 = vpack.c.b16 %v201, %v197
    %v242 = vpack.c.b16 %v202, %v198
    %v243 = vpack.c.b16 %v203, %v199
    %v244 = vpack.c.b16 %v204, %v200
    %v245 = vpack.c.b16 %v209, %v205
    %v246 = vpack.c.b16 %v210, %v206
    %v247 = vpack.c.b16 %v211, %v207
    %v248 = vpack.c.b16 %v212, %v208
    %v249 = vpack.c.b16 %v217, %v213
    %v250 = vpack.c.b16 %v218, %v214
    %v251 = vpack.c.b16 %v219, %v215
    %v252 = vpack.c.b16 %v220, %v216
    %285 = vmatprep.subr.bf16.mxu0 %v222
    %286 = vmatpush1.bf16.msra.mxu0 %v221
    %287 = vmatprep.subr.bf16.mxu0 %v226
    %288 = vmatpush1.bf16.msra.mxu0 %v225
    %289 = vmatprep.subr.bf16.mxu0 %v230
    %290 = vmatpush1.bf16.msra.mxu0 %v229
    %291 = vmatprep.subr.bf16.mxu0 %v234
    %292 = vmatpush1.bf16.msra.mxu0 %v233
    %293 = vmatprep.subr.bf16.mxu0 %v238
    %294 = vmatpush1.bf16.msra.mxu0 %v237
    %295 = vmatprep.subr.bf16.mxu0 %v242
    %296 = vmatpush1.bf16.msra.mxu0 %v241
    %297 = vmatprep.subr.bf16.mxu0 %v246
    %298 = vmatpush1.bf16.msra.mxu0 %v245
    %299 = vmatprep.subr.bf16.mxu0 %v250
    %300 = vmatpush1.bf16.msra.mxu0 %v249
    %301 = vmatprep.subr.bf16.mxu0 0
    %302 = vmatpush1.bf16.msra.mxu0 0
    %303 = vmatprep.subr.bf16.mxu0 0
    %304 = vmatpush1.bf16.msra.mxu0 0
    %305 = vmatprep.subr.bf16.mxu0 0
    %306 = vmatpush1.bf16.msra.mxu0 0
    %307 = vmatprep.subr.bf16.mxu0 0
    %308 = vmatpush1.bf16.msra.mxu0 0
    %309 = vmatprep.subr.bf16.mxu0 0
    %310 = vmatpush1.bf16.msra.mxu0 0
    %311 = vmatprep.subr.bf16.mxu0 0
    %312 = vmatpush1.bf16.msra.mxu0 0
    %313 = vmatprep.subr.bf16.mxu0 0
    %314 = vmatpush1.bf16.msra.mxu0 0
    %315 = vmatprep.subr.bf16.mxu0 0
    %316 = vmatpush1.bf16.msra.mxu0 0
    %317 = vmatprep.mubr.bf16.mxu0 0
    %318 = vmatmul.mubr.bf16.gmra.mrb[0].mxu0 %v123
    %v319 = vpop.f32.mrb[0].mxu0
    %v320 = vadd.f32 %v102, %v319
    %v321 = vpop.f32.mrb[0].mxu0
    %v322 = vadd.f32 %v106, %v321
    %v323 = vpop.f32.mrb[0].mxu0
    %v324 = vadd.f32 %v102, %v323
    %v325 = vpop.f32.mrb[0].mxu0
    %v326 = vadd.f32 %v106, %v325
    %327 = vdwg.mxu0
    %328 = vmatprep.subr.bf16.mxu0 %v224
    %329 = vmatpush1.bf16.msra.mxu0 %v223
    %330 = vmatprep.subr.bf16.mxu0 %v228
    %331 = vmatpush1.bf16.msra.mxu0 %v227
    %332 = vmatprep.subr.bf16.mxu0 %v232
    %333 = vmatpush1.bf16.msra.mxu0 %v231
    %334 = vmatprep.subr.bf16.mxu0 %v236
    %335 = vmatpush1.bf16.msra.mxu0 %v235
    %336 = vmatprep.subr.bf16.mxu0 %v240
    %337 = vmatpush1.bf16.msra.mxu0 %v239
    %338 = vmatprep.subr.bf16.mxu0 %v244
    %339 = vmatpush1.bf16.msra.mxu0 %v243
    %340 = vmatprep.subr.bf16.mxu0 %v248
    %341 = vmatpush1.bf16.msra.mxu0 %v247
    %342 = vmatprep.subr.bf16.mxu0 %v252
    %343 = vmatpush1.bf16.msra.mxu0 %v251
    %344 = vmatprep.subr.bf16.mxu0 0
    %345 = vmatpush1.bf16.msra.mxu0 0
    %346 = vmatprep.subr.bf16.mxu0 0
    %347 = vmatpush1.bf16.msra.mxu0 0
    %348 = vmatprep.subr.bf16.mxu0 0
    %349 = vmatpush1.bf16.msra.mxu0 0
    %350 = vmatprep.subr.bf16.mxu0 0
    %351 = vmatpush1.bf16.msra.mxu0 0
    %352 = vmatprep.subr.bf16.mxu0 0
    %353 = vmatpush1.bf16.msra.mxu0 0
    %354 = vmatprep.subr.bf16.mxu0 0
    %355 = vmatpush1.bf16.msra.mxu0 0
    %356 = vmatprep.subr.bf16.mxu0 0
    %357 = vmatpush1.bf16.msra.mxu0 0
    %358 = vmatprep.subr.bf16.mxu0 0
    %359 = vmatpush1.bf16.msra.mxu0 0
    %360 = vmatprep.mubr.bf16.mxu0 0
    %361 = vmatmul.mubr.bf16.gmra.mrb[0].mxu0 %v123
    %v362 = vpop.f32.mrb[0].mxu0
    %v363 = vadd.f32 %v110, %v362
    %v364 = vpop.f32.mrb[0].mxu0
    %v365 = vadd.f32 %v114, %v364
    %v366 = vpop.f32.mrb[0].mxu0
    %v367 = vadd.f32 %v110, %v366
    %v368 = vpop.f32.mrb[0].mxu0
    %v369 = vadd.f32 %v114, %v368
    %370 = vdwg.mxu0
    %v371 = vmax.f32 %v320, 0.0
    %v372 = vmax.f32 %v322, 0.0
    %v373 = vmax.f32 %v363, 0.0
    %v374 = vmax.f32 %v365, 0.0
    %v375 = vmax.f32 %v324, 0.0
    %v376 = vmax.f32 %v326, 0.0
    %v377 = vmax.f32 %v367, 0.0
    %v378 = vmax.f32 %v369, 0.0
    %v379 = vmul.f32 %v371, %v371
    %v380 = vmul.f32 %v372, %v372
    %v381 = vmul.f32 %v373, %v373
    %v382 = vmul.f32 %v374, %v374
    %v383 = vmul.f32 %v375, %v375
    %v384 = vmul.f32 %v376, %v376
    %v385 = vmul.f32 %v377, %v377
    %v386 = vmul.f32 %v378, %v378
    %v387 = vpack.c.bf16 %v383, %v379
    %v388 = vpack.c.bf16 %v384, %v380
    %v389 = vpack.c.bf16 %v385, %v381
    %v390 = vpack.c.bf16 %v386, %v382
    %v391 = vld [vmem:[#allocation7] sm:$0xf]
    %v392 = vld [vmem:[#allocation7 + $0x4] sm:$0xf]
    %v393 = vld [vmem:[#allocation7 + $0x8] sm:$0xf]
    %v394 = vld [vmem:[#allocation7 + $0xc] sm:$0xf]
    %v395 = vld [vmem:[#allocation7 + $0x10] sm:$0xf]
    %v396 = vld [vmem:[#allocation7 + $0x14] sm:$0xf]
    %v397 = vld [vmem:[#allocation7 + $0x18] sm:$0xf]
    %v398 = vld [vmem:[#allocation7 + $0x1c] sm:$0xf]
    %v399 = vld [vmem:[#allocation7 + $0x20] sm:$0xf]
    %v400 = vld [vmem:[#allocation7 + $0x24] sm:$0xf]
    %v401 = vld [vmem:[#allocation7 + $0x28] sm:$0xf]
    %v402 = vld [vmem:[#allocation7 + $0x2c] sm:$0xf]
    %v403 = vld [vmem:[#allocation7 + $0x30] sm:$0xf]
    %v404 = vld [vmem:[#allocation7 + $0x34] sm:$0xf]
    %v405 = vld [vmem:[#allocation7 + $0x38] sm:$0xf]
    %v406 = vld [vmem:[#allocation7 + $0x3c] sm:$0xf]
    %v407 = vld [vmem:[#allocation7 + $0x40] sm:$0xf]
    %v408 = vld [vmem:[#allocation7 + $0x44] sm:$0xf]
    %v409 = vld [vmem:[#allocation7 + $0x48] sm:$0xf]
    %v410 = vld [vmem:[#allocation7 + $0x4c] sm:$0xf]
    %v411 = vld [vmem:[#allocation7 + $0x50] sm:$0xf]
    %v412 = vld [vmem:[#allocation7 + $0x54] sm:$0xf]
    %v413 = vld [vmem:[#allocation7 + $0x58] sm:$0xf]
    %v414 = vld [vmem:[#allocation7 + $0x5c] sm:$0xf]
    %v415 = vld [vmem:[#allocation7 + $0x60] sm:$0xf]
    %v416 = vld [vmem:[#allocation7 + $0x64] sm:$0xf]
    %v417 = vld [vmem:[#allocation7 + $0x68] sm:$0xf]
    %v418 = vld [vmem:[#allocation7 + $0x6c] sm:$0xf]
    %v419 = vld [vmem:[#allocation7 + $0x70] sm:$0xf]
    %v420 = vld [vmem:[#allocation7 + $0x74] sm:$0xf]
    %v421 = vld [vmem:[#allocation7 + $0x78] sm:$0xf]
    %v422 = vld [vmem:[#allocation7 + $0x7c] sm:$0xf]
    %v423 = vld [vmem:[#allocation7 + $0x80] sm:$0xf]
    %v424 = vld [vmem:[#allocation7 + $0x84] sm:$0xf]
    %v425 = vld [vmem:[#allocation7 + $0x88] sm:$0xf]
    %v426 = vld [vmem:[#allocation7 + $0x8c] sm:$0xf]
    %v427 = vld [vmem:[#allocation7 + $0x90] sm:$0xf]
    %v428 = vld [vmem:[#allocation7 + $0x94] sm:$0xf]
    %v429 = vld [vmem:[#allocation7 + $0x98] sm:$0xf]
    %v430 = vld [vmem:[#allocation7 + $0x9c] sm:$0xf]
    %v431 = vld [vmem:[#allocation7 + $0xa0] sm:$0xf]
    %v432 = vld [vmem:[#allocation7 + $0xa4] sm:$0xf]
    %v433 = vld [vmem:[#allocation7 + $0xa8] sm:$0xf]
    %v434 = vld [vmem:[#allocation7 + $0xac] sm:$0xf]
    %v435 = vld [vmem:[#allocation7 + $0xb0] sm:$0xf]
    %v436 = vld [vmem:[#allocation7 + $0xb4] sm:$0xf]
    %v437 = vld [vmem:[#allocation7 + $0xb8] sm:$0xf]
    %v438 = vld [vmem:[#allocation7 + $0xbc] sm:$0xf]
    %v439 = vld [vmem:[#allocation7 + $0xc0] sm:$0xf]
    %v440 = vld [vmem:[#allocation7 + $0xc4] sm:$0xf]
    %v441 = vld [vmem:[#allocation7 + $0xc8] sm:$0xf]
    %v442 = vld [vmem:[#allocation7 + $0xcc] sm:$0xf]
    %v443 = vld [vmem:[#allocation7 + $0xd0] sm:$0xf]
    %v444 = vld [vmem:[#allocation7 + $0xd4] sm:$0xf]
    %v445 = vld [vmem:[#allocation7 + $0xd8] sm:$0xf]
    %v446 = vld [vmem:[#allocation7 + $0xdc] sm:$0xf]
    %v447 = vld [vmem:[#allocation7 + $0xe0] sm:$0xf]
    %v448 = vld [vmem:[#allocation7 + $0xe4] sm:$0xf]
    %v449 = vld [vmem:[#allocation7 + $0xe8] sm:$0xf]
    %v450 = vld [vmem:[#allocation7 + $0xec] sm:$0xf]
    %v451 = vld [vmem:[#allocation7 + $0xf0] sm:$0xf]
    %v452 = vld [vmem:[#allocation7 + $0xf4] sm:$0xf]
    %v453 = vld [vmem:[#allocation7 + $0xf8] sm:$0xf]
    %v454 = vld [vmem:[#allocation7 + $0xfc] sm:$0xf]
    %v455 = vld [vmem:[%s4] sm:$0x1]
    %v457 = vlaneseq
    %v458 = vshrl.u32 %v457, 7
    %v459 = vsub.s32 0, %v458
    %v460 = vrot.slane %v455, %v459
    %v526 = vunpack.c.l.b16 %v391
    %v527 = vunpack.c.l.b16 %v392
    %v528 = vunpack.c.l.b16 %v393
    %v529 = vunpack.c.l.b16 %v394
    %v530 = vunpack.c.l.b16 %v395
    %v531 = vunpack.c.l.b16 %v396
    %v532 = vunpack.c.l.b16 %v397
    %v533 = vunpack.c.l.b16 %v398
    %v534 = vunpack.c.l.b16 %v399
    %v535 = vunpack.c.l.b16 %v400
    %v536 = vunpack.c.l.b16 %v401
    %v537 = vunpack.c.l.b16 %v402
    %v538 = vunpack.c.l.b16 %v403
    %v539 = vunpack.c.l.b16 %v404
    %v540 = vunpack.c.l.b16 %v405
    %v541 = vunpack.c.l.b16 %v406
    %v542 = vunpack.c.l.b16 %v407
    %v543 = vunpack.c.l.b16 %v408
    %v544 = vunpack.c.l.b16 %v409
    %v545 = vunpack.c.l.b16 %v410
    %v546 = vunpack.c.l.b16 %v411
    %v547 = vunpack.c.l.b16 %v412
    %v548 = vunpack.c.l.b16 %v413
    %v549 = vunpack.c.l.b16 %v414
    %v550 = vunpack.c.l.b16 %v415
    %v551 = vunpack.c.l.b16 %v416
    %v552 = vunpack.c.l.b16 %v417
    %v553 = vunpack.c.l.b16 %v418
    %v554 = vunpack.c.l.b16 %v419
    %v555 = vunpack.c.l.b16 %v420
    %v556 = vunpack.c.l.b16 %v421
    %v557 = vunpack.c.l.b16 %v422
    %v558 = vunpack.c.l.b16 %v423
    %v559 = vunpack.c.l.b16 %v424
    %v560 = vunpack.c.l.b16 %v425
    %v561 = vunpack.c.l.b16 %v426
    %v562 = vunpack.c.l.b16 %v427
    %v563 = vunpack.c.l.b16 %v428
    %v564 = vunpack.c.l.b16 %v429
    %v565 = vunpack.c.l.b16 %v430
    %v566 = vunpack.c.l.b16 %v431
    %v567 = vunpack.c.l.b16 %v432
    %v568 = vunpack.c.l.b16 %v433
    %v569 = vunpack.c.l.b16 %v434
    %v570 = vunpack.c.l.b16 %v435
    %v571 = vunpack.c.l.b16 %v436
    %v572 = vunpack.c.l.b16 %v437
    %v573 = vunpack.c.l.b16 %v438
    %v574 = vunpack.c.l.b16 %v439
    %v575 = vunpack.c.l.b16 %v440
    %v576 = vunpack.c.l.b16 %v441
    %v577 = vunpack.c.l.b16 %v442
    %v578 = vunpack.c.l.b16 %v443
    %v579 = vunpack.c.l.b16 %v444
    %v580 = vunpack.c.l.b16 %v445
    %v581 = vunpack.c.l.b16 %v446
    %v582 = vunpack.c.l.b16 %v447
    %v583 = vunpack.c.l.b16 %v448
    %v584 = vunpack.c.l.b16 %v449
    %v585 = vunpack.c.l.b16 %v450
    %v586 = vunpack.c.l.b16 %v451
    %v587 = vunpack.c.l.b16 %v452
    %v588 = vunpack.c.l.b16 %v453
    %v589 = vunpack.c.l.b16 %v454
    %v590 = vpack.c.b16 %v527, %v526
    %v591 = vpack.c.b16 %v529, %v528
    %v592 = vpack.c.b16 %v531, %v530
    %v593 = vpack.c.b16 %v533, %v532
    %v594 = vpack.c.b16 %v535, %v534
    %v595 = vpack.c.b16 %v537, %v536
    %v596 = vpack.c.b16 %v539, %v538
    %v597 = vpack.c.b16 %v541, %v540
    %v598 = vpack.c.b16 %v543, %v542
    %v599 = vpack.c.b16 %v545, %v544
    %v600 = vpack.c.b16 %v547, %v546
    %v601 = vpack.c.b16 %v549, %v548
    %v602 = vpack.c.b16 %v551, %v550
    %v603 = vpack.c.b16 %v553, %v552
    %v604 = vpack.c.b16 %v555, %v554
    %v605 = vpack.c.b16 %v557, %v556
    %v606 = vpack.c.b16 %v559, %v558
    %v607 = vpack.c.b16 %v561, %v560
    %v608 = vpack.c.b16 %v563, %v562
    %v609 = vpack.c.b16 %v565, %v564
    %v610 = vpack.c.b16 %v567, %v566
    %v611 = vpack.c.b16 %v569, %v568
    %v612 = vpack.c.b16 %v571, %v570
    %v613 = vpack.c.b16 %v573, %v572
    %v614 = vpack.c.b16 %v575, %v574
    %v615 = vpack.c.b16 %v577, %v576
    %v616 = vpack.c.b16 %v579, %v578
    %v617 = vpack.c.b16 %v581, %v580
    %v618 = vpack.c.b16 %v583, %v582
    %v619 = vpack.c.b16 %v585, %v584
    %v620 = vpack.c.b16 %v587, %v586
    %v621 = vpack.c.b16 %v589, %v588
    %654 = vmatprep.subr.bf16.mxu0 0
    %655 = vmatpush1.bf16.msra.mxu0 %v590
    %656 = vmatprep.subr.bf16.mxu0 0
    %657 = vmatpush1.bf16.msra.mxu0 %v591
    %658 = vmatprep.subr.bf16.mxu0 0
    %659 = vmatpush1.bf16.msra.mxu0 %v592
    %660 = vmatprep.subr.bf16.mxu0 0
    %661 = vmatpush1.bf16.msra.mxu0 %v593
    %662 = vmatprep.subr.bf16.mxu0 0
    %663 = vmatpush1.bf16.msra.mxu0 %v594
    %664 = vmatprep.subr.bf16.mxu0 0
    %665 = vmatpush1.bf16.msra.mxu0 %v595
    %666 = vmatprep.subr.bf16.mxu0 0
    %667 = vmatpush1.bf16.msra.mxu0 %v596
    %668 = vmatprep.subr.bf16.mxu0 0
    %669 = vmatpush1.bf16.msra.mxu0 %v597
    %670 = vmatprep.subr.bf16.mxu0 0
    %671 = vmatpush1.bf16.msra.mxu0 %v598
    %672 = vmatprep.subr.bf16.mxu0 0
    %673 = vmatpush1.bf16.msra.mxu0 %v599
    %674 = vmatprep.subr.bf16.mxu0 0
    %675 = vmatpush1.bf16.msra.mxu0 %v600
    %676 = vmatprep.subr.bf16.mxu0 0
    %677 = vmatpush1.bf16.msra.mxu0 %v601
    %678 = vmatprep.subr.bf16.mxu0 0
    %679 = vmatpush1.bf16.msra.mxu0 %v602
    %680 = vmatprep.subr.bf16.mxu0 0
    %681 = vmatpush1.bf16.msra.mxu0 %v603
    %682 = vmatprep.subr.bf16.mxu0 0
    %683 = vmatpush1.bf16.msra.mxu0 %v604
    %684 = vmatprep.subr.bf16.mxu0 0
    %685 = vmatpush1.bf16.msra.mxu0 %v605
    %686 = vmatprep.mubr.bf16.mxu0 %v388
    %687 = vmatmul.mubr.bf16.gmra.mrb[0].mxu0 %v387
    %v688 = vpop.f32.mrb[0].mxu0
    %v689 = vadd.f32 %v460, %v688
    %v690 = vpop.f32.mrb[0].mxu0
    %v691 = vpop.f32.mrb[0].mxu0
    %v692 = vadd.f32 %v460, %v691
    %v693 = vpop.f32.mrb[0].mxu0
    %694 = vdwg.mxu0
    %695 = vmatprep.subr.bf16.mxu0 0
    %696 = vmatpush1.bf16.msra.mxu0 %v606
    %697 = vmatprep.subr.bf16.mxu0 0
    %698 = vmatpush1.bf16.msra.mxu0 %v607
    %699 = vmatprep.subr.bf16.mxu0 0
    %700 = vmatpush1.bf16.msra.mxu0 %v608
    %701 = vmatprep.subr.bf16.mxu0 0
    %702 = vmatpush1.bf16.msra.mxu0 %v609
    %703 = vmatprep.subr.bf16.mxu0 0
    %704 = vmatpush1.bf16.msra.mxu0 %v610
    %705 = vmatprep.subr.bf16.mxu0 0
    %706 = vmatpush1.bf16.msra.mxu0 %v611
    %707 = vmatprep.subr.bf16.mxu0 0
    %708 = vmatpush1.bf16.msra.mxu0 %v612
    %709 = vmatprep.subr.bf16.mxu0 0
    %710 = vmatpush1.bf16.msra.mxu0 %v613
    %711 = vmatprep.subr.bf16.mxu0 0
    %712 = vmatpush1.bf16.msra.mxu0 %v614
    %713 = vmatprep.subr.bf16.mxu0 0
    %714 = vmatpush1.bf16.msra.mxu0 %v615
    %715 = vmatprep.subr.bf16.mxu0 0
    %716 = vmatpush1.bf16.msra.mxu0 %v616
    %717 = vmatprep.subr.bf16.mxu0 0
    %718 = vmatpush1.bf16.msra.mxu0 %v617
    %719 = vmatprep.subr.bf16.mxu0 0
    %720 = vmatpush1.bf16.msra.mxu0 %v618
    %721 = vmatprep.subr.bf16.mxu0 0
    %722 = vmatpush1.bf16.msra.mxu0 %v619
    %723 = vmatprep.subr.bf16.mxu0 0
    %724 = vmatpush1.bf16.msra.mxu0 %v620
    %725 = vmatprep.subr.bf16.mxu0 0
    %726 = vmatpush1.bf16.msra.mxu0 %v621
    %727 = vmatprep.mubr.bf16.mxu0 %v390
    %728 = vmatmul.mubr.bf16.gmra.mrb[0].mxu0 %v389
    %v729 = vpop.f32.mrb[0].mxu0
    %v730 = vadd.f32 %v689, %v729
    %v731 = vpop.f32.mrb[0].mxu0
    %v732 = vpop.f32.mrb[0].mxu0
    %v733 = vadd.f32 %v692, %v732
    %v734 = vpop.f32.mrb[0].mxu0
    %735 = vdwg.mxu0
    %736 = vst [vmem:[#allocation8] sm:$0xff] %v730
    %737 = vst [vmem:[#allocation8 + $0x8] sm:$0xff] %v733
    // Predicated region
    $region34: #{tpu_custom_call.1} parent=1 // pred_check
      _
    $region35: #{tpu_custom_call.1} parent=1 // pred_check_branch
      %739 = sbr.rel (0) target = $region37
    $region36: #{tpu_custom_call.1} parent=1 // pred_region
      %s741 = ssub.s32 256, 256
      %742 = vsyncadd [#allocation4], %s741
      %s743 = sshll.u32 [#allocation8], 4
      %s744 = int_to_ptr.vmem [resolvable:$true] %s743
      %749 = dma.vmem_to_hbm [thread:$0]  %s744, 256, %s5, [#allocation4], 128, 128, 8
    $region37: #{tpu_custom_call.1} parent=1 // pred_fallthru
      _
    // Predicated region
    $region38: #{tpu_custom_call.1} parent=1 // pred_check
      _
    $region39: #{tpu_custom_call.1} parent=1 // pred_check_branch
      %751 = sbr.rel (0) target = $region41
    $region40: #{tpu_custom_call.1} parent=1 // pred_region
      %752 = dma.done [#allocation4], 256
    $region41: #{tpu_custom_call.1} parent=1 // pred_fallthru
      _
    %753 = vsyncpa [#allocation3], 1
    %754 = vsyncpa [#allocation6], 1
    %755 = vsyncpa [#allocation4], 1

</llo_original>
